<compile_context>
chip_gen: v7x
topology: tpu7x:2x2x1
jax: 0.10.0
libtpu: 0.0.40
codegen_flags: <defaults>
</compile_context>

<pallas_src>
import jax
import jax.numpy as jnp
from jax.experimental import pallas as pl
from jax.experimental.pallas import tpu as pltpu

N = 256            # batch (hard-coded by the module's reshape)
L = 512            # sequence length (hard-coded by the module's reshape)
K = 5              # Conv1d kernel_size
L_OUT = L - K + 1  # 508, "valid" convolution
TM = 128           # rows per grid step -> grid=(2,): 2 parallel steps (both v7x TCs)


# ----------------------------------------------------------------------------
# Production kernel: o2 = reshape(x, (256, 512)).  Pure identity copy; the conv
# output is discarded by the module, so it is NOT computed here (XLA would not
# DCE a custom-call output).
# ----------------------------------------------------------------------------
def cnnblock_kernel(x_ref, o2_ref):
    o2_ref[...] = x_ref[...]


def cnnblock_forward(x, weight=None, bias=None):
    """Forward of CNNBlock. weight/bias are accepted for API parity with the
    module but are unused: the conv result o1 is discarded by the module, so
    the production kernel skips it entirely.

    x: any array with 256*512 elements. Returns o2: (256, 512) f32.
    """
    del weight, bias  # conv path is dead in the module's forward
    x2d = x.reshape(N, L)
    o2 = pl.pallas_call(
        cnnblock_kernel,
        out_shape=jax.ShapeDtypeStruct((N, L), jnp.float32),
        grid_spec=pltpu.PrefetchScalarGridSpec(
            num_scalar_prefetch=0,
            grid=(N // TM,),
            in_specs=[pl.BlockSpec((TM, L), lambda i: (i, 0))],
            out_specs=pl.BlockSpec((TM, L), lambda i: (i, 0)),
        ),
        # o2 aliases x: under jit (with donation) the copy DMA disappears entirely.
        input_output_aliases={0: 0},
        compiler_params=pltpu.CompilerParams(
            dimension_semantics=("parallel",)),
    )(x2d)
    return o2


# ----------------------------------------------------------------------------
# DEBUG-ONLY conv kernel (not part of the production forward): validates that the
# removed Conv1d path would have matched PyTorch semantics.  Micro-opts per review:
# ref-sliced taps, bias folded into tap 0, lane-dense 512-wide output slab
# (valid conv in columns [0, 508), zero padding in the last 4 columns).
# ----------------------------------------------------------------------------
def conv_debug_kernel(w_ref, b_ref, x_ref, o1_ref):
    # w_ref: SMEM f32[5], b_ref: SMEM f32[1]
    # x_ref: VMEM f32[TM, 512], o1_ref: VMEM f32[TM, 512] (lane-dense, padded)
    acc = x_ref[:, 0:L_OUT] * w_ref[0] + b_ref[0]
    for k in range(1, K):
        acc = acc + x_ref[:, k:k + L_OUT] * w_ref[k]
    o1_ref[:, :L_OUT] = acc
    o1_ref[:, L_OUT:] = jnp.zeros((TM, L - L_OUT), jnp.float32)


def conv_debug(x2d, weight, bias):
    """Returns the (padded, lane-dense) conv output (256, 512); valid cols [0, 508)."""
    return pl.pallas_call(
        conv_debug_kernel,
        out_shape=jax.ShapeDtypeStruct((N, L), jnp.float32),
        grid_spec=pltpu.PrefetchScalarGridSpec(
            num_scalar_prefetch=0,
            grid=(N // TM,),
            in_specs=[
                pl.BlockSpec(memory_space=pltpu.MemorySpace.SMEM),  # weight
                pl.BlockSpec(memory_space=pltpu.MemorySpace.SMEM),  # bias
                pl.BlockSpec((TM, L), lambda i: (i, 0)),            # x tile
            ],
            out_specs=pl.BlockSpec((TM, L), lambda i: (i, 0)),      # padded o1 tile
        ),
        compiler_params=pltpu.CompilerParams(
            dimension_semantics=("parallel",)),
    )(weight, bias, x2d)


def _ref_conv1d(x2d, weight, bias):
    # pure-JAX reference for the (discarded) conv path
    acc = jnp.zeros((N, L_OUT), jnp.float32)
    for k in range(K):
        acc = acc + weight[k] * x2d[:, k:k + L_OUT]
    return acc + bias[0]


if __name__ == "__main__":
    key = jax.random.PRNGKey(0)
    kx, kw, kb = jax.random.split(key, 3)

    # The module hard-codes reshape(x, (256, 1, 512)); use (256, 512) directly.
    x = jax.random.normal(kx, (N, L), dtype=jnp.float32)

    # Deterministic Conv1d(1, 1, 5) params, PyTorch-style uniform(-1/sqrt(5), 1/sqrt(5)).
    bound = 1.0 / jnp.sqrt(jnp.float32(K))
    weight = jax.random.uniform(kw, (K,), jnp.float32, -bound, bound)
    bias = jax.random.uniform(kb, (1,), jnp.float32, -bound, bound)

    # Production forward (conv path removed as dead code).
    o2 = jax.block_until_ready(cnnblock_forward(x, weight, bias))
    assert o2.shape == (N, L)
    assert bool(jnp.all(o2 == x.reshape(N, L)))

    # Debug-only self-check: the conv semantics (were they needed) match PyTorch Conv1d.
    o1_padded = jax.block_until_ready(conv_debug(x, weight, bias))
    ref_o1 = _ref_conv1d(x, weight, bias)
    assert bool(jnp.allclose(o1_padded[:, :L_OUT], ref_o1, atol=1e-5, rtol=1e-5))
    assert bool(jnp.all(o1_padded[:, L_OUT:] == 0.0))

    print("KERNEL_OK")
</pallas_src>

<mosaic_0001>
module attributes {stable_mosaic.version = 11 : i64} {
  func.func @cnnblock_kernel(%arg0: i32, %arg1: memref<128x512xf32, #tpu.memory_space<vmem>>, %arg2: memref<128x512xf32, #tpu.memory_space<vmem>>) attributes {dimension_semantics = [#tpu.dimension_semantics<parallel>], iteration_bounds = array<i64: 2>, scalar_prefetch = 0 : i64, scratch_operands = 0 : i64, tpu.core_type = #tpu.core_type<tc>, window_params = [{transform_indices = @transform_0, window_bounds = array<i64: 128, 512>}, {transform_indices = @transform_1, window_bounds = array<i64: 128, 512>}]} {
    %c0 = arith.constant 0 : index
    %c0_0 = arith.constant 0 : index
    %0 = vector.load %arg1[%c0, %c0_0] : memref<128x512xf32, #tpu.memory_space<vmem>>, vector<128x512xf32>
    %c0_1 = arith.constant 0 : index
    %c0_2 = arith.constant 0 : index
    %1 = vector.load %arg2[%c0_1, %c0_2] : memref<128x512xf32, #tpu.memory_space<vmem>>, vector<128x512xf32>
    tpu.vector_store %arg2[%c0_1, %c0_2], %0 {strides = array<i32>} : memref<128x512xf32, #tpu.memory_space<vmem>>, vector<128x512xf32>,
    return
  }
  func.func @transform_0(%arg0: i32) -> (i32, i32) {
    %c0_i32 = arith.constant 0 : i32
    %c0_i32_0 = arith.constant 0 : i32
    return %arg0, %c0_i32 : i32, i32
  }
  func.func @transform_1(%arg0: i32) -> (i32, i32) {
    %c0_i32 = arith.constant 0 : i32
    %c0_i32_0 = arith.constant 0 : i32
    return %arg0, %c0_i32 : i32, i32
  }
}

</mosaic_0001>

<llo_original>
// kernel: tpu_custom_call.1
$region0: #{tpu_custom_call.1}
  #allocation0 [shape = 'u32[]', space=smem, size = 0x4, offset = 0x4, fixed_abs, tag = 'smem constant byte address 0x4 - core index']
  #allocation1 [shape = 'u32[144,128]{1,0:T(1,128)}', space=vmem, size = 0x12000, scoped, tag = 'internal scratch']
  %s0 = inlined_call_operand.hbm [shape: f32[256,512], index: 0, kind: input, shape index: {}, may-alias: {0,1}]
  %s1 = inlined_call_operand.hbm [shape: f32[256,512], index: 1, kind: output, shape index: {}, may-alias: {0,1}]
  %s2 = sld [smem:[#allocation0]]
  $region41: #{tpu_custom_call.1} parent=0
    _
  %s4 = ssub.s32 1, %s2
  %s5 = scalar_select 0, %s4, %s2
  $region1: #{tpu_custom_call.1} parent=0
    #allocation2 [shape = 'u8[524288]{0}', space=vmem, size = 0x80000, scoped, tag = 'input window, operand 0']
    #allocation3 [shape = 's32[2]{0}', space=sflag, size = 0x8, scoped, tag = 'scoped memory for tpu_custom_call.1']
    #allocation4 [shape = 's32[2]{0}', space=sflag, size = 0x8, scoped, tag = 'scoped memory for tpu_custom_call.1']
    #allocation5 [shape = 'u8[524288]{0}', space=vmem, size = 0x80000, scoped, tag = 'output window, operand 0']
    %6 = vsyncpa [#allocation3], 0
    %s7 = scalar_lea.sflag [#allocation3], 1
    %8 = vsyncpa %s7, 0
    %9 = vsyncpa [#allocation4], 0
    %s10 = scalar_lea.sflag [#allocation4], 1
    %11 = vsyncpa %s10, 0
    loop: start=0, step=1, limit=4
    $region2: #{tpu_custom_call.1} parent=1 // loop_pre_header
      _
    $region3: #{tpu_custom_call.1} parent=1 // loop_header
      %s13 = sphi 0, %s17
      %p14 = scmp.ge.s32.totalorder %s13, 4
      %s23 = sphi 0, %s25
      %s26 = sphi 0, %s23
      %s27 = sphi 0, %s26
      %s43 = sphi 0, %s27
      %s49 = sphi 0, %s51
      %s52 = sphi 0, %s49
      %s53 = sphi 0, %s52
      %s69 = sphi 0, %s53
    $region4: #{tpu_custom_call.1} parent=1 // loop_header_branch
      %16 = sbr.rel (%p14) target = $region8
    $region5: #{tpu_custom_call.1} parent=1 // loop_body
      %s18 = ssub.s32 %s13, 1
      %s19 = ssub.s32 %s13, 2
      %s20 = sadd.s32 %s13, 1
      %s21 = ssub.s32 %s13, %s20
      %p22 = scmp.eq.s32.totalorder %s21, 0
      %s24 = sadd.s32 %s23, 1
      %s25 = scalar_select %p22, %s23, %s24
      %p28 = pneg %p22
      %p29 = scmp.eq.s32.totalorder %s13, 1
      %p30 = por %p28, %p29
      %p31 = scmp.ne.s32.totalorder %s23, %s26
      %p32 = scmp.eq.s32.totalorder %s13, 0
      %p33 = por %p31, %p32
      %p34 = scmp.ne.s32.totalorder %s23, %s26
      %p35 = scmp.eq.s32.totalorder %s18, 1
      %p36 = por %p34, %p35
      %p37 = scmp.ne.s32.totalorder %s26, %s27
      %p38 = scmp.eq.s32.totalorder %s18, 0
      %p39 = por %p37, %p38
      %p40 = scmp.ne.s32.totalorder %s26, %s27
      %p41 = scmp.eq.s32.totalorder %s19, 1
      %p42 = por %p40, %p41
      %p44 = scmp.ne.s32.totalorder %s27, %s43
      %p45 = scmp.eq.s32.totalorder %s19, 0
      %p46 = por %p44, %p45
      %s47 = ssub.s32 %s13, %s20
      %p48 = scmp.eq.s32.totalorder %s47, 0
      %s50 = sadd.s32 %s49, 1
      %s51 = scalar_select %p48, %s49, %s50
      %p54 = pneg %p48
      %p55 = scmp.eq.s32.totalorder %s13, 1
      %p56 = por %p54, %p55
      %p57 = scmp.ne.s32.totalorder %s49, %s52
      %p58 = scmp.eq.s32.totalorder %s13, 0
      %p59 = por %p57, %p58
      %p60 = scmp.ne.s32.totalorder %s49, %s52
      %p61 = scmp.eq.s32.totalorder %s18, 1
      %p62 = por %p60, %p61
      %p63 = scmp.ne.s32.totalorder %s52, %s53
      %p64 = scmp.eq.s32.totalorder %s18, 0
      %p65 = por %p63, %p64
      %p66 = scmp.ne.s32.totalorder %s52, %s53
      %p67 = scmp.eq.s32.totalorder %s19, 1
      %p68 = por %p66, %p67
      %p70 = scmp.ne.s32.totalorder %s53, %s69
      %p71 = scmp.eq.s32.totalorder %s19, 0
      %p72 = por %p70, %p71
      %p73 = scmp.le.s32.totalorder 1, %s13
      %p74 = scmp.lt.s32.totalorder %s13, 3
      %p75 = pnand %p73, %p74
      %p76 = pneg %p75
      // Predicated region
      $region9: #{tpu_custom_call.1} parent=5 // pred_check
        _
      $region10: #{tpu_custom_call.1} parent=5 // pred_check_branch
        %78 = sbr.rel (%p75) target = $region12
      $region11: #{tpu_custom_call.1} parent=5 // pred_region
        %s79 = ssub.s32 %s13, 1
      $region12: #{tpu_custom_call.1} parent=5 // pred_fallthru
        _
      %p80 = scmp.lt.s32.totalorder %s13, 2
      // Predicated region
      $region13: #{tpu_custom_call.1} parent=5 // pred_check
        %p81 = pneg %p80
      $region14: #{tpu_custom_call.1} parent=5 // pred_check_branch
        %83 = sbr.rel (%p81) target = $region16
      $region15: #{tpu_custom_call.1} parent=5 // pred_region
        // Predicated region
        $region17: #{tpu_custom_call.1} parent=15 // pred_check
          %p84 = pneg %p33
        $region18: #{tpu_custom_call.1} parent=15 // pred_check_branch
          %86 = sbr.rel (%p84) target = $region20
        $region19: #{tpu_custom_call.1} parent=15 // pred_region
          %s87 = sand.u32 %s23, 1
          %s88 = scalar_lea.sflag [#allocation3], %s87
          %s89 = sand.u32 %s23, 1
          %s90 = smul.addr %s89, 512
          %s91 = scalar_lea.vmem [#allocation2], %s90
          %s92 = smul.u32 16, %s13
          %s94 = ssub.s32 8192, 8192
          %95 = vsyncadd %s88, %s94
          %s96 = smul.addr %s92, 4
          %s97 = smul.addr %s96, 128
          %s98 = scalar_lea.hbm %s0, %s97
          %s99 = sshll.u32 %s91, 4
          %s100 = int_to_ptr.vmem [resolvable:$true] %s99
          %105 = dma.hbm_to_vmem [thread:$0]  %s98, 8192, %s100, %s88, 512, 512, 32
        $region20: #{tpu_custom_call.1} parent=15 // pred_fallthru
          _
      $region16: #{tpu_custom_call.1} parent=5 // pred_fallthru
        _
      %p106 = scmp.le.s32.totalorder 1, %s13
      %p107 = scmp.lt.s32.totalorder %s13, 3
      %p108 = pnand %p106, %p107
      %p109 = pneg %p108
      // Predicated region
      $region21: #{tpu_custom_call.1} parent=5 // pred_check
        _
      $region22: #{tpu_custom_call.1} parent=5 // pred_check_branch
        %111 = sbr.rel (%p108) target = $region24
      $region23: #{tpu_custom_call.1} parent=5 // pred_region
        %s112 = ssub.s32 %s13, 1
        %s113 = sand.u32 %s26, 1
        %s114 = scalar_lea.sflag [#allocation3], %s113
        %s115 = sand.u32 %s26, 1
        %s116 = smul.addr %s115, 512
        %s117 = scalar_lea.vmem [#allocation2], %s116
        // Predicated region
        $region25: #{tpu_custom_call.1} parent=23 // pred_check
          %p118 = pneg %p39
        $region26: #{tpu_custom_call.1} parent=23 // pred_check_branch
          %120 = sbr.rel (%p118) target = $region28
        $region27: #{tpu_custom_call.1} parent=23 // pred_region
          %121 = dma.done %s114, 8192
        $region28: #{tpu_custom_call.1} parent=23 // pred_fallthru
          _
        %s122 = sand.u32 %s26, 1
        %s123 = scalar_lea.sflag [#allocation3], %s122
        %s124 = sand.u32 %s26, 1
        %s125 = smul.addr %s124, 512
        %s126 = scalar_lea.vmem [#allocation2], %s125
        %p127 = pneg %p39
        %p128 = pneg %p36
        %p129 = pneg %p65
        %p130 = pneg %p62
        %s131 = sand.u32 %s52, 1
        %s132 = scalar_lea.sflag [#allocation4], %s131
        %s133 = sand.u32 %s52, 1
        %s134 = smul.addr %s133, 512
        %s135 = scalar_lea.vmem [#allocation5], %s134
        %s136 = smul.u32 16, %s18
        %s137 = smul.u32 16, %s18
        %v138 = vld [vmem:[%s117] sm:$0xff]
        %v139 = vld [vmem:[%s117 + $0x8] sm:$0xff]
        %v140 = vld [vmem:[%s117 + $0x10] sm:$0xff]
        %v141 = vld [vmem:[%s117 + $0x18] sm:$0xff]
        %v142 = vld [vmem:[%s117 + $0x20] sm:$0xff]
        %v143 = vld [vmem:[%s117 + $0x28] sm:$0xff]
        %v144 = vld [vmem:[%s117 + $0x30] sm:$0xff]
        %v145 = vld [vmem:[%s117 + $0x38] sm:$0xff]
        %v146 = vld [vmem:[%s117 + $0x40] sm:$0xff]
        %v147 = vld [vmem:[%s117 + $0x48] sm:$0xff]
        %v148 = vld [vmem:[%s117 + $0x50] sm:$0xff]
        %v149 = vld [vmem:[%s117 + $0x58] sm:$0xff]
        %v150 = vld [vmem:[%s117 + $0x60] sm:$0xff]
        %v151 = vld [vmem:[%s117 + $0x68] sm:$0xff]
        %v152 = vld [vmem:[%s117 + $0x70] sm:$0xff]
        %v153 = vld [vmem:[%s117 + $0x78] sm:$0xff]
        %v154 = vld [vmem:[%s117 + $0x80] sm:$0xff]
        %v155 = vld [vmem:[%s117 + $0x88] sm:$0xff]
        %v156 = vld [vmem:[%s117 + $0x90] sm:$0xff]
        %v157 = vld [vmem:[%s117 + $0x98] sm:$0xff]
        %v158 = vld [vmem:[%s117 + $0xa0] sm:$0xff]
        %v159 = vld [vmem:[%s117 + $0xa8] sm:$0xff]
        %v160 = vld [vmem:[%s117 + $0xb0] sm:$0xff]
        %v161 = vld [vmem:[%s117 + $0xb8] sm:$0xff]
        %v162 = vld [vmem:[%s117 + $0xc0] sm:$0xff]
        %v163 = vld [vmem:[%s117 + $0xc8] sm:$0xff]
        %v164 = vld [vmem:[%s117 + $0xd0] sm:$0xff]
        %v165 = vld [vmem:[%s117 + $0xd8] sm:$0xff]
        %v166 = vld [vmem:[%s117 + $0xe0] sm:$0xff]
        %v167 = vld [vmem:[%s117 + $0xe8] sm:$0xff]
        %v168 = vld [vmem:[%s117 + $0xf0] sm:$0xff]
        %v169 = vld [vmem:[%s117 + $0xf8] sm:$0xff]
        %v170 = vld [vmem:[%s117 + $0x100] sm:$0xff]
        %v171 = vld [vmem:[%s117 + $0x108] sm:$0xff]
        %v172 = vld [vmem:[%s117 + $0x110] sm:$0xff]
        %v173 = vld [vmem:[%s117 + $0x118] sm:$0xff]
        %v174 = vld [vmem:[%s117 + $0x120] sm:$0xff]
        %v175 = vld [vmem:[%s117 + $0x128] sm:$0xff]
        %v176 = vld [vmem:[%s117 + $0x130] sm:$0xff]
        %v177 = vld [vmem:[%s117 + $0x138] sm:$0xff]
        %v178 = vld [vmem:[%s117 + $0x140] sm:$0xff]
        %v179 = vld [vmem:[%s117 + $0x148] sm:$0xff]
        %v180 = vld [vmem:[%s117 + $0x150] sm:$0xff]
        %v181 = vld [vmem:[%s117 + $0x158] sm:$0xff]
        %v182 = vld [vmem:[%s117 + $0x160] sm:$0xff]
        %v183 = vld [vmem:[%s117 + $0x168] sm:$0xff]
        %v184 = vld [vmem:[%s117 + $0x170] sm:$0xff]
        %v185 = vld [vmem:[%s117 + $0x178] sm:$0xff]
        %v186 = vld [vmem:[%s117 + $0x180] sm:$0xff]
        %v187 = vld [vmem:[%s117 + $0x188] sm:$0xff]
        %v188 = vld [vmem:[%s117 + $0x190] sm:$0xff]
        %v189 = vld [vmem:[%s117 + $0x198] sm:$0xff]
        %v190 = vld [vmem:[%s117 + $0x1a0] sm:$0xff]
        %v191 = vld [vmem:[%s117 + $0x1a8] sm:$0xff]
        %v192 = vld [vmem:[%s117 + $0x1b0] sm:$0xff]
        %v193 = vld [vmem:[%s117 + $0x1b8] sm:$0xff]
        %v194 = vld [vmem:[%s117 + $0x1c0] sm:$0xff]
        %v195 = vld [vmem:[%s117 + $0x1c8] sm:$0xff]
        %v196 = vld [vmem:[%s117 + $0x1d0] sm:$0xff]
        %v197 = vld [vmem:[%s117 + $0x1d8] sm:$0xff]
        %v198 = vld [vmem:[%s117 + $0x1e0] sm:$0xff]
        %v199 = vld [vmem:[%s117 + $0x1e8] sm:$0xff]
        %v200 = vld [vmem:[%s117 + $0x1f0] sm:$0xff]
        %v201 = vld [vmem:[%s117 + $0x1f8] sm:$0xff]
        %202 = vst [vmem:[%s135] sm:$0xff] %v138
        %203 = vst [vmem:[%s135 + $0x8] sm:$0xff] %v139
        %204 = vst [vmem:[%s135 + $0x10] sm:$0xff] %v140
        %205 = vst [vmem:[%s135 + $0x18] sm:$0xff] %v141
        %206 = vst [vmem:[%s135 + $0x20] sm:$0xff] %v142
        %207 = vst [vmem:[%s135 + $0x28] sm:$0xff] %v143
        %208 = vst [vmem:[%s135 + $0x30] sm:$0xff] %v144
        %209 = vst [vmem:[%s135 + $0x38] sm:$0xff] %v145
        %210 = vst [vmem:[%s135 + $0x40] sm:$0xff] %v146
        %211 = vst [vmem:[%s135 + $0x48] sm:$0xff] %v147
        %212 = vst [vmem:[%s135 + $0x50] sm:$0xff] %v148
        %213 = vst [vmem:[%s135 + $0x58] sm:$0xff] %v149
        %214 = vst [vmem:[%s135 + $0x60] sm:$0xff] %v150
        %215 = vst [vmem:[%s135 + $0x68] sm:$0xff] %v151
        %216 = vst [vmem:[%s135 + $0x70] sm:$0xff] %v152
        %217 = vst [vmem:[%s135 + $0x78] sm:$0xff] %v153
        %218 = vst [vmem:[%s135 + $0x80] sm:$0xff] %v154
        %219 = vst [vmem:[%s135 + $0x88] sm:$0xff] %v155
        %220 = vst [vmem:[%s135 + $0x90] sm:$0xff] %v156
        %221 = vst [vmem:[%s135 + $0x98] sm:$0xff] %v157
        %222 = vst [vmem:[%s135 + $0xa0] sm:$0xff] %v158
        %223 = vst [vmem:[%s135 + $0xa8] sm:$0xff] %v159
        %224 = vst [vmem:[%s135 + $0xb0] sm:$0xff] %v160
        %225 = vst [vmem:[%s135 + $0xb8] sm:$0xff] %v161
        %226 = vst [vmem:[%s135 + $0xc0] sm:$0xff] %v162
        %227 = vst [vmem:[%s135 + $0xc8] sm:$0xff] %v163
        %228 = vst [vmem:[%s135 + $0xd0] sm:$0xff] %v164
        %229 = vst [vmem:[%s135 + $0xd8] sm:$0xff] %v165
        %230 = vst [vmem:[%s135 + $0xe0] sm:$0xff] %v166
        %231 = vst [vmem:[%s135 + $0xe8] sm:$0xff] %v167
        %232 = vst [vmem:[%s135 + $0xf0] sm:$0xff] %v168
        %233 = vst [vmem:[%s135 + $0xf8] sm:$0xff] %v169
        %234 = vst [vmem:[%s135 + $0x100] sm:$0xff] %v170
        %235 = vst [vmem:[%s135 + $0x108] sm:$0xff] %v171
        %236 = vst [vmem:[%s135 + $0x110] sm:$0xff] %v172
        %237 = vst [vmem:[%s135 + $0x118] sm:$0xff] %v173
        %238 = vst [vmem:[%s135 + $0x120] sm:$0xff] %v174
        %239 = vst [vmem:[%s135 + $0x128] sm:$0xff] %v175
        %240 = vst [vmem:[%s135 + $0x130] sm:$0xff] %v176
        %241 = vst [vmem:[%s135 + $0x138] sm:$0xff] %v177
        %242 = vst [vmem:[%s135 + $0x140] sm:$0xff] %v178
        %243 = vst [vmem:[%s135 + $0x148] sm:$0xff] %v179
        %244 = vst [vmem:[%s135 + $0x150] sm:$0xff] %v180
        %245 = vst [vmem:[%s135 + $0x158] sm:$0xff] %v181
        %246 = vst [vmem:[%s135 + $0x160] sm:$0xff] %v182
        %247 = vst [vmem:[%s135 + $0x168] sm:$0xff] %v183
        %248 = vst [vmem:[%s135 + $0x170] sm:$0xff] %v184
        %249 = vst [vmem:[%s135 + $0x178] sm:$0xff] %v185
        %250 = vst [vmem:[%s135 + $0x180] sm:$0xff] %v186
        %251 = vst [vmem:[%s135 + $0x188] sm:$0xff] %v187
        %252 = vst [vmem:[%s135 + $0x190] sm:$0xff] %v188
        %253 = vst [vmem:[%s135 + $0x198] sm:$0xff] %v189
        %254 = vst [vmem:[%s135 + $0x1a0] sm:$0xff] %v190
        %255 = vst [vmem:[%s135 + $0x1a8] sm:$0xff] %v191
        %256 = vst [vmem:[%s135 + $0x1b0] sm:$0xff] %v192
        %257 = vst [vmem:[%s135 + $0x1b8] sm:$0xff] %v193
        %258 = vst [vmem:[%s135 + $0x1c0] sm:$0xff] %v194
        %259 = vst [vmem:[%s135 + $0x1c8] sm:$0xff] %v195
        %260 = vst [vmem:[%s135 + $0x1d0] sm:$0xff] %v196
        %261 = vst [vmem:[%s135 + $0x1d8] sm:$0xff] %v197
        %262 = vst [vmem:[%s135 + $0x1e0] sm:$0xff] %v198
        %263 = vst [vmem:[%s135 + $0x1e8] sm:$0xff] %v199
        %264 = vst [vmem:[%s135 + $0x1f0] sm:$0xff] %v200
        %265 = vst [vmem:[%s135 + $0x1f8] sm:$0xff] %v201
        %s266 = sand.u32 %s52, 1
        %s267 = scalar_lea.sflag [#allocation4], %s266
        %s268 = sand.u32 %s52, 1
        %s269 = smul.addr %s268, 512
        %s270 = scalar_lea.vmem [#allocation5], %s269
        // Predicated region
        $region29: #{tpu_custom_call.1} parent=23 // pred_check
          %p271 = pneg %p62
        $region30: #{tpu_custom_call.1} parent=23 // pred_check_branch
          %273 = sbr.rel (%p271) target = $region32
        $region31: #{tpu_custom_call.1} parent=23 // pred_region
          %s274 = smul.u32 16, %s18
          %s276 = ssub.s32 8192, 8192
          %277 = vsyncadd %s267, %s276
          %s278 = smul.addr %s274, 4
          %s279 = smul.addr %s278, 128
          %s280 = scalar_lea.hbm %s1, %s279
          %s281 = sshll.u32 %s270, 4
          %s282 = int_to_ptr.vmem [resolvable:$true] %s281
          %287 = dma.vmem_to_hbm [thread:$0]  %s282, 8192, %s280, %s267, 512, 512, 32
        $region32: #{tpu_custom_call.1} parent=23 // pred_fallthru
          _
      $region24: #{tpu_custom_call.1} parent=5 // pred_fallthru
        _
      %p288 = scmp.le.s32.totalorder 2, %s13
      // Predicated region
      $region33: #{tpu_custom_call.1} parent=5 // pred_check
        %p289 = pneg %p288
      $region34: #{tpu_custom_call.1} parent=5 // pred_check_branch
        %291 = sbr.rel (%p289) target = $region36
      $region35: #{tpu_custom_call.1} parent=5 // pred_region
        %s292 = ssub.s32 %s13, 2
        // Predicated region
        $region37: #{tpu_custom_call.1} parent=35 // pred_check
          %p293 = pneg %p68
        $region38: #{tpu_custom_call.1} parent=35 // pred_check_branch
          %295 = sbr.rel (%p293) target = $region40
        $region39: #{tpu_custom_call.1} parent=35 // pred_region
          %s296 = sand.u32 %s53, 1
          %s297 = scalar_lea.sflag [#allocation4], %s296
          %s298 = sand.u32 %s53, 1
          %s299 = smul.addr %s298, 512
          %s300 = scalar_lea.vmem [#allocation5], %s299
          %301 = dma.done %s297, 8192
        $region40: #{tpu_custom_call.1} parent=35 // pred_fallthru
          _
      $region36: #{tpu_custom_call.1} parent=5 // pred_fallthru
        _
    $region6: #{tpu_custom_call.1} parent=1 // loop_footer
      %s17 = sadd.s32 1, %s13
    $region7: #{tpu_custom_call.1} parent=1 // loop_footer_branch
      %12 = sbr.rel target = $region3
    $region8: #{tpu_custom_call.1} parent=1 // loop_exit
      _
    %302 = vsyncpa [#allocation3], 1
    %s303 = scalar_lea.sflag [#allocation3], 1
    %304 = vsyncpa %s303, 1
    %305 = vsyncpa [#allocation4], 1
    %s306 = scalar_lea.sflag [#allocation4], 1
    %307 = vsyncpa %s306, 1

</llo_original>
